<compile_context>
chip_gen: v5e
topology: v5e:2x2
jax: 0.10.0
libtpu: 0.0.40
codegen_flags: <defaults>
</compile_context>

<pallas_src>
import functools

import jax
import jax.numpy as jnp
from jax.experimental import pallas as pl
from jax.experimental.pallas import tpu as pltpu


def _round_up(x, m):
    return ((x + m - 1) // m) * m


def _aucm_kernel(p_ref, a_ref, b_ref, alpha_ref, yp_ref, yt_ref,
                 out_ref, acc_ref, *, inv_n):
    i = pl.program_id(0)

    @pl.when(i == 0)
    def _init():
        acc_ref[...] = jnp.zeros_like(acc_ref)

    yp = jax.nn.sigmoid(yp_ref[...].astype(jnp.float32))   # [TILE_N, C_pad]
    yt = yt_ref[...].astype(jnp.float32)                   # [TILE_N, C_pad]

    p = p_ref[...]          # [1, C_pad]  (already float32)
    a = a_ref[...]
    b = b_ref[...]
    alpha = alpha_ref[...]

    # Hoisted per-class coefficients (computed once per grid step on [1, C]).
    one_m_p = 1.0 - p
    c_pos = 2.0 * alpha * one_m_p   # coefficient on yp for positive samples
    c_neg = 2.0 * alpha * p         # coefficient on yp for negative samples

    # Strict-equality masks, matching the PyTorch reference.  Padded rows /
    # classes have y_true == -1, so both masks are 0 there.
    pos = (yt == 1.0).astype(jnp.float32)
    neg = (yt == 0.0).astype(jnp.float32)

    # Per-element contribution to the batch mean (the per-class constant term
    # is added once at finalize).
    contrib = (pos * (one_m_p * (yp - a) ** 2 - c_pos * yp)
               + neg * (p * (yp - b) ** 2 + c_neg * yp))    # [TILE_N, C_pad]

    # Pure VPU accumulate; no cross-sublane reduce per step.
    acc_ref[...] += contrib

    @pl.when(i == pl.num_programs(0) - 1)
    def _finalize():
        # Single cross-sublane + cross-lane collapse, once per kernel.
        per_class = jnp.sum(acc_ref[...], axis=0, keepdims=True) * jnp.float32(inv_n)
        # 2*alpha*p*(1-p) - p*(1-p)*alpha^2 == p*(1-p)*alpha*(2 - alpha)
        const_c = p * one_m_p * alpha * (2.0 - alpha)
        out_ref[...] = jnp.sum(per_class + const_c).reshape(1, 1)


def aucm_loss(y_pred, y_true, p, a, b, alpha, *, tile_n=None):
    """AUCM multi-label (sigmoid) loss.  Returns a scalar float32."""
    n, c = y_pred.shape

    # Lane-dense class axis.
    c_pad = _round_up(c, 128)

    # Batch tile: biggest tile under a conservative per-buffer VMEM budget
    # (safe on v7x's 64 MiB VMEM; well under the 32 MiB scoped limit we set).
    itemsize = jnp.dtype(y_pred.dtype).itemsize
    if tile_n is None:
        budget_bytes = 3 << 20                       # per input pipeline buffer
        rows = max(8, budget_bytes // (c_pad * itemsize))
        tile_n = min(_round_up(n, 8), rows)
    tile_n = max(8, (tile_n // 8) * 8)
    n_pad = _round_up(n, tile_n)

    # Pad in the wrapper; padded elements contribute exactly zero:
    #   y_true pad = -1  -> both equality masks are 0
    #   params pad = 0   -> per-class constant term is 0 for padded classes
    if (n_pad != n) or (c_pad != c):
        yp_in = jnp.pad(y_pred, ((0, n_pad - n), (0, c_pad - c)))
        yt_in = jnp.pad(y_true, ((0, n_pad - n), (0, c_pad - c)),
                        constant_values=-1)
    else:
        yp_in, yt_in = y_pred, y_true

    def prep_param(v):
        v = jnp.asarray(v, jnp.float32).reshape(1, c)
        if c_pad != c:
            v = jnp.pad(v, ((0, 0), (0, c_pad - c)))
        return v

    p2, a2, b2, al2 = (prep_param(v) for v in (p, a, b, alpha))

    grid = (n_pad // tile_n,)
    kernel = functools.partial(_aucm_kernel, inv_n=1.0 / float(n))

    param_spec = pl.BlockSpec((1, c_pad), lambda i: (0, 0))
    data_spec = pl.BlockSpec((tile_n, c_pad), lambda i: (i, 0))

    out = pl.pallas_call(
        kernel,
        out_shape=jax.ShapeDtypeStruct((1, 1), jnp.float32),
        grid_spec=pltpu.PrefetchScalarGridSpec(
            num_scalar_prefetch=0,
            grid=grid,
            in_specs=[param_spec, param_spec, param_spec, param_spec,
                      data_spec, data_spec],
            out_specs=pl.BlockSpec((1, 1), lambda i: (0, 0)),
            scratch_shapes=[pltpu.VMEM((tile_n, c_pad), jnp.float32)],
        ),
        compiler_params=pltpu.CompilerParams(
            dimension_semantics=("arbitrary",),
            vmem_limit_bytes=32 * 1024 * 1024,
        ),
    )(p2, a2, b2, al2, yp_in, yt_in)
    return out[0, 0]


def reference_loss(y_pred, y_true, p, a, b, alpha):
    """Pure-JAX reference mirroring the PyTorch forward loop."""
    yp = jax.nn.sigmoid(y_pred.astype(jnp.float32))
    yt = y_true.astype(jnp.float32)
    total = 0.0
    for idx in range(y_pred.shape[1]):
        ypi = yp[:, idx:idx + 1]
        yti = yt[:, idx:idx + 1]
        pos = (yti == 1.0).astype(jnp.float32)
        neg = (yti == 0.0).astype(jnp.float32)
        loss = ((1 - p[idx]) * jnp.mean((ypi - a[idx]) ** 2 * pos)
                + p[idx] * jnp.mean((ypi - b[idx]) ** 2 * neg)
                + 2 * alpha[idx] * (p[idx] * (1 - p[idx])
                                    + jnp.mean(p[idx] * ypi * neg
                                               - (1 - p[idx]) * ypi * pos))
                - p[idx] * (1 - p[idx]) * alpha[idx] ** 2)
        total = total + loss
    return total


if __name__ == "__main__":
    num_classes = 10
    batch = 20   # deliberately NOT a multiple of the forced tile below

    # Deterministic "module parameters" (per __init__: a, b, alpha start at 0;
    # p comes from imratio).  Use nonzero a/b/alpha for a nontrivial check.
    imratio = jnp.linspace(0.05, 0.3, num_classes, dtype=jnp.float32)
    a = jnp.linspace(0.0, 0.2, num_classes, dtype=jnp.float32)
    b = jnp.linspace(0.3, 0.1, num_classes, dtype=jnp.float32)
    alpha = jnp.linspace(0.0, 0.5, num_classes, dtype=jnp.float32)

    key = jax.random.PRNGKey(0)
    k1, k2 = jax.random.split(key)
    y_pred = jax.random.normal(k1, (batch, num_classes), dtype=jnp.float32)
    y_true = jax.random.bernoulli(k2, 0.3, (batch, num_classes)).astype(jnp.float32)

    ref = reference_loss(y_pred, y_true, imratio, a, b, alpha)

    # (1) multi-step path: small forced tile -> 3 grid steps + padded rows.
    loss_tiled = aucm_loss(y_pred, y_true, imratio, a, b, alpha, tile_n=8)
    jax.block_until_ready(loss_tiled)
    assert jnp.allclose(loss_tiled, ref, atol=1e-5, rtol=1e-5), (loss_tiled, ref)

    # (2) default auto-sized tile path (single step for this small shape).
    loss_auto = aucm_loss(y_pred, y_true, imratio, a, b, alpha)
    jax.block_until_ready(loss_auto)
    assert jnp.allclose(loss_auto, ref, atol=1e-5, rtol=1e-5), (loss_auto, ref)

    print("KERNEL_OK")
</pallas_src>

<mosaic_0001>
module attributes {stable_mosaic.version = 11 : i64} {
  func.func @_aucm_kernel(%arg0: i32, %arg1: memref<1x128xf32, #tpu.memory_space<vmem>>, %arg2: memref<1x128xf32, #tpu.memory_space<vmem>>, %arg3: memref<1x128xf32, #tpu.memory_space<vmem>>, %arg4: memref<1x128xf32, #tpu.memory_space<vmem>>, %arg5: memref<8x128xf32, #tpu.memory_space<vmem>>, %arg6: memref<8x128xf32, #tpu.memory_space<vmem>>, %arg7: memref<1x1xf32, #tpu.memory_space<vmem>>, %arg8: memref<8x128xf32, #tpu.memory_space<vmem>>) attributes {dimension_semantics = [#tpu.dimension_semantics<arbitrary>], iteration_bounds = array<i64: 3>, scalar_prefetch = 0 : i64, scratch_operands = 1 : i64, tpu.core_type = #tpu.core_type<tc>, window_params = [{pipeline_mode = #tpu.pipeline_mode<synchronous>, transform_indices = @transform_0, window_bounds = array<i64: 1, 128>}, {pipeline_mode = #tpu.pipeline_mode<synchronous>, transform_indices = @transform_1, window_bounds = array<i64: 1, 128>}, {pipeline_mode = #tpu.pipeline_mode<synchronous>, transform_indices = @transform_2, window_bounds = array<i64: 1, 128>}, {pipeline_mode = #tpu.pipeline_mode<synchronous>, transform_indices = @transform_3, window_bounds = array<i64: 1, 128>}, {transform_indices = @transform_4, window_bounds = array<i64: 8, 128>}, {transform_indices = @transform_5, window_bounds = array<i64: 8, 128>}, {pipeline_mode = #tpu.pipeline_mode<synchronous>, transform_indices = @transform_6, window_bounds = array<i64: 1, 1>}]} {
    %c0_i32 = arith.constant 0 : i32
    %0 = arith.cmpi eq, %arg0, %c0_i32 : i32
    %1 = arith.extui %0 : i1 to i32
    %c0_i32_0 = arith.constant 0 : i32
    %2 = arith.cmpi ne, %1, %c0_i32_0 : i32
    scf.if %2 {
      %cst_22 = arith.constant 0.000000e+00 : f32
      %55 = vector.broadcast %cst_22 : f32 to vector<8x128xf32>
      %c0_23 = arith.constant 0 : index
      %c0_24 = arith.constant 0 : index
      %56 = vector.load %arg8[%c0_23, %c0_24] : memref<8x128xf32, #tpu.memory_space<vmem>>, vector<8x128xf32>
      tpu.vector_store %arg8[%c0_23, %c0_24], %55 {strides = array<i32>} : memref<8x128xf32, #tpu.memory_space<vmem>>, vector<8x128xf32>,
    } else {
    }
    %c0 = arith.constant 0 : index
    %c0_1 = arith.constant 0 : index
    %3 = vector.load %arg5[%c0, %c0_1] : memref<8x128xf32, #tpu.memory_space<vmem>>, vector<8x128xf32>
    %4 = arith.negf %3 : vector<8x128xf32>
    %5 = math.exp %4 : vector<8x128xf32>
    %cst = arith.constant 1.000000e+00 : f32
    %6 = vector.broadcast %cst : f32 to vector<8x128xf32>
    %7 = arith.addf %6, %5 : vector<8x128xf32>
    %8 = arith.divf %6, %7 : vector<8x128xf32>
    %c0_2 = arith.constant 0 : index
    %c0_3 = arith.constant 0 : index
    %9 = vector.load %arg6[%c0_2, %c0_3] : memref<8x128xf32, #tpu.memory_space<vmem>>, vector<8x128xf32>
    %c0_4 = arith.constant 0 : index
    %c0_5 = arith.constant 0 : index
    %10 = vector.load %arg1[%c0_4, %c0_5] : memref<1x128xf32, #tpu.memory_space<vmem>>, vector<1x128xf32>
    %c0_6 = arith.constant 0 : index
    %c0_7 = arith.constant 0 : index
    %11 = vector.load %arg2[%c0_6, %c0_7] : memref<1x128xf32, #tpu.memory_space<vmem>>, vector<1x128xf32>
    %c0_8 = arith.constant 0 : index
    %c0_9 = arith.constant 0 : index
    %12 = vector.load %arg3[%c0_8, %c0_9] : memref<1x128xf32, #tpu.memory_space<vmem>>, vector<1x128xf32>
    %c0_10 = arith.constant 0 : index
    %c0_11 = arith.constant 0 : index
    %13 = vector.load %arg4[%c0_10, %c0_11] : memref<1x128xf32, #tpu.memory_space<vmem>>, vector<1x128xf32>
    %cst_12 = arith.constant 1.000000e+00 : f32
    %14 = vector.broadcast %cst_12 : f32 to vector<1x128xf32>
    %15 = arith.subf %14, %10 : vector<1x128xf32>
    %cst_13 = arith.constant 2.000000e+00 : f32
    %16 = vector.broadcast %cst_13 : f32 to vector<1x128xf32>
    %17 = arith.mulf %16, %13 : vector<1x128xf32>
    %18 = arith.mulf %17, %15 : vector<1x128xf32>
    %cst_14 = arith.constant 2.000000e+00 : f32
    %19 = vector.broadcast %cst_14 : f32 to vector<1x128xf32>
    %20 = arith.mulf %19, %13 : vector<1x128xf32>
    %21 = arith.mulf %20, %10 : vector<1x128xf32>
    %cst_15 = arith.constant 1.000000e+00 : f32
    %22 = vector.broadcast %cst_15 : f32 to vector<8x128xf32>
    %23 = arith.cmpf oeq, %9, %22 : vector<8x128xf32>
    %24 = arith.extui %23 : vector<8x128xi1> to vector<8x128xi32>
    %25 = arith.sitofp %24 : vector<8x128xi32> to vector<8x128xf32>
    %cst_16 = arith.constant 0.000000e+00 : f32
    %26 = vector.broadcast %cst_16 : f32 to vector<8x128xf32>
    %27 = arith.cmpf oeq, %9, %26 : vector<8x128xf32>
    %28 = arith.extui %27 : vector<8x128xi1> to vector<8x128xi32>
    %29 = arith.sitofp %28 : vector<8x128xi32> to vector<8x128xf32>
    %30 = vector.broadcast %11 : vector<1x128xf32> to vector<8x128xf32>
    %31 = arith.subf %8, %30 : vector<8x128xf32>
    %32 = arith.mulf %31, %31 : vector<8x128xf32>
    %33 = vector.broadcast %15 : vector<1x128xf32> to vector<8x128xf32>
    %34 = arith.mulf %33, %32 : vector<8x128xf32>
    %35 = vector.broadcast %18 : vector<1x128xf32> to vector<8x128xf32>
    %36 = arith.mulf %35, %8 : vector<8x128xf32>
    %37 = arith.subf %34, %36 : vector<8x128xf32>
    %38 = arith.mulf %25, %37 : vector<8x128xf32>
    %39 = vector.broadcast %12 : vector<1x128xf32> to vector<8x128xf32>
    %40 = arith.subf %8, %39 : vector<8x128xf32>
    %41 = arith.mulf %40, %40 : vector<8x128xf32>
    %42 = vector.broadcast %10 : vector<1x128xf32> to vector<8x128xf32>
    %43 = arith.mulf %42, %41 : vector<8x128xf32>
    %44 = vector.broadcast %21 : vector<1x128xf32> to vector<8x128xf32>
    %45 = arith.mulf %44, %8 : vector<8x128xf32>
    %46 = arith.addf %43, %45 : vector<8x128xf32>
    %47 = arith.mulf %29, %46 : vector<8x128xf32>
    %48 = arith.addf %38, %47 : vector<8x128xf32>
    %c0_17 = arith.constant 0 : index
    %c0_18 = arith.constant 0 : index
    %49 = vector.load %arg8[%c0_17, %c0_18] : memref<8x128xf32, #tpu.memory_space<vmem>>, vector<8x128xf32>
    %50 = arith.addf %49, %48 : vector<8x128xf32>
    %c0_19 = arith.constant 0 : index
    %c0_20 = arith.constant 0 : index
    %51 = vector.load %arg8[%c0_19, %c0_20] : memref<8x128xf32, #tpu.memory_space<vmem>>, vector<8x128xf32>
    tpu.vector_store %arg8[%c0_19, %c0_20], %50 {strides = array<i32>} : memref<8x128xf32, #tpu.memory_space<vmem>>, vector<8x128xf32>,
    %c2_i32 = arith.constant 2 : i32
    %52 = arith.cmpi eq, %arg0, %c2_i32 : i32
    %53 = arith.extui %52 : i1 to i32
    %c0_i32_21 = arith.constant 0 : i32
    %54 = arith.cmpi ne, %53, %c0_i32_21 : i32
    scf.if %54 {
      %c0_22 = arith.constant 0 : index
      %c0_23 = arith.constant 0 : index
      %55 = vector.load %arg8[%c0_22, %c0_23] : memref<8x128xf32, #tpu.memory_space<vmem>>, vector<8x128xf32>
      %cst_24 = arith.constant dense<0.000000e+00> : vector<128xf32>
      %56 = vector.multi_reduction <add>, %55, %cst_24 [0] : vector<8x128xf32> to vector<128xf32>
      %57 = vector.shape_cast %56 : vector<128xf32> to vector<1x128xf32>
      %cst_25 = arith.constant 5.000000e-02 : f32
      %58 = vector.broadcast %cst_25 : f32 to vector<1x128xf32>
      %59 = arith.mulf %57, %58 : vector<1x128xf32>
      %60 = arith.mulf %10, %15 : vector<1x128xf32>
      %61 = arith.mulf %60, %13 : vector<1x128xf32>
      %cst_26 = arith.constant 2.000000e+00 : f32
      %62 = vector.broadcast %cst_26 : f32 to vector<1x128xf32>
      %63 = arith.subf %62, %13 : vector<1x128xf32>
      %64 = arith.mulf %61, %63 : vector<1x128xf32>
      %65 = arith.addf %59, %64 : vector<1x128xf32>
      %66 = vector.shape_cast %65 : vector<1x128xf32> to vector<1x1x128xf32>
      %cst_27 = arith.constant dense<0.000000e+00> : vector<1xf32>
      %67 = vector.multi_reduction <add>, %66, %cst_27 [1, 2] : vector<1x1x128xf32> to vector<1xf32>
      %68 = vector.shape_cast %67 : vector<1xf32> to vector<1x1x1xf32>
      %69 = vector.extract %68[0, 0, 0] : f32 from vector<1x1x1xf32>
      %70 = vector.broadcast %69 : f32 to vector<1x1xf32>
      %c0_28 = arith.constant 0 : index
      %c0_29 = arith.constant 0 : index
      %71 = vector.load %arg7[%c0_28, %c0_29] : memref<1x1xf32, #tpu.memory_space<vmem>>, vector<1x1xf32>
      tpu.vector_store %arg7[%c0_28, %c0_29], %70 {strides = array<i32>} : memref<1x1xf32, #tpu.memory_space<vmem>>, vector<1x1xf32>,
    } else {
    }
    return
  }
  func.func @transform_0(%arg0: i32) -> (i32, i32) {
    %c0_i32 = arith.constant 0 : i32
    %c0_i32_0 = arith.constant 0 : i32
    %c0_i32_1 = arith.constant 0 : i32
    return %c0_i32, %c0_i32_0 : i32, i32
  }
  func.func @transform_1(%arg0: i32) -> (i32, i32) {
    %c0_i32 = arith.constant 0 : i32
    %c0_i32_0 = arith.constant 0 : i32
    %c0_i32_1 = arith.constant 0 : i32
    return %c0_i32, %c0_i32_0 : i32, i32
  }
  func.func @transform_2(%arg0: i32) -> (i32, i32) {
    %c0_i32 = arith.constant 0 : i32
    %c0_i32_0 = arith.constant 0 : i32
    %c0_i32_1 = arith.constant 0 : i32
    return %c0_i32, %c0_i32_0 : i32, i32
  }
  func.func @transform_3(%arg0: i32) -> (i32, i32) {
    %c0_i32 = arith.constant 0 : i32
    %c0_i32_0 = arith.constant 0 : i32
    %c0_i32_1 = arith.constant 0 : i32
    return %c0_i32, %c0_i32_0 : i32, i32
  }
  func.func @transform_4(%arg0: i32) -> (i32, i32) {
    %c0_i32 = arith.constant 0 : i32
    %c0_i32_0 = arith.constant 0 : i32
    return %arg0, %c0_i32 : i32, i32
  }
  func.func @transform_5(%arg0: i32) -> (i32, i32) {
    %c0_i32 = arith.constant 0 : i32
    %c0_i32_0 = arith.constant 0 : i32
    return %arg0, %c0_i32 : i32, i32
  }
  func.func @transform_6(%arg0: i32) -> (i32, i32) {
    %c0_i32 = arith.constant 0 : i32
    %c0_i32_0 = arith.constant 0 : i32
    %c0_i32_1 = arith.constant 0 : i32
    return %c0_i32, %c0_i32_0 : i32, i32
  }
}

</mosaic_0001>

<llo_original>
// kernel: tpu_custom_call.1
$region0: #{tpu_custom_call.1}
  #allocation0 [shape = 'u32[]', space=smem, size = 0x4, offset = 0x4, fixed_abs, tag = 'smem constant byte address 0x4 - core index']
  #allocation1 [shape = 'u32[72,128]{1,0:T(1,128)}', space=vmem, size = 0x9000, scoped, tag = 'internal scratch']
  #allocation2 [shape = 'f32[8,128]{1,0:T(8,128)}', space=vmem, size = 0x1000, scoped, tag = 'scratch operand']
  %s0 = inlined_call_operand.hbm [shape: f32[1,128], index: 0, kind: input, shape index: {}]
  %s1 = inlined_call_operand.hbm [shape: f32[1,128], index: 1, kind: input, shape index: {}]
  %s2 = inlined_call_operand.vmem [shape: f32[1,128], index: 2, kind: input, shape index: {}]
  %s3 = inlined_call_operand.vmem [shape: f32[1,128], index: 3, kind: input, shape index: {}]
  %s4 = inlined_call_operand.hbm [shape: f32[24,128], index: 4, kind: input, shape index: {}]
  %s5 = inlined_call_operand.hbm [shape: f32[24,128], index: 5, kind: input, shape index: {}]
  %s6 = inlined_call_operand.hbm [shape: f32[1,1], index: 6, kind: output, shape index: {}]
  %s7 = sld [smem:[#allocation0]]
  $region81: #{tpu_custom_call.1} parent=0
    _
  %s9 = ssub.s32 1, %s7
  %s10 = scalar_select 0, %s9, %s7
  $region1: #{tpu_custom_call.1} parent=0
    #allocation3 [shape = 'u8[512]{0}', space=vmem, size = 0x400, scoped, tag = 'input window, operand 0, single buffered']
    #allocation4 [shape = 's32[2]{0}', space=sflag, size = 0x8, scoped, tag = 'scoped memory for tpu_custom_call.1']
    #allocation5 [shape = 's32[2]{0}', space=sflag, size = 0x8, scoped, tag = 'scoped memory for tpu_custom_call.1']
    #allocation6 [shape = 'u8[512]{0}', space=vmem, size = 0x400, scoped, tag = 'input window, operand 1, single buffered']
    #allocation7 [shape = 's32[1]{0}', space=sflag, size = 0x4, scoped, tag = 'scoped memory for tpu_custom_call.1']
    #allocation8 [shape = 'u8[8192]{0}', space=vmem, size = 0x2000, scoped, tag = 'input window, operand 4']
    #allocation9 [shape = 'u8[8192]{0}', space=vmem, size = 0x2000, scoped, tag = 'input window, operand 5']
    #allocation10 [shape = 'u8[512]{0}', space=vmem, size = 0x400, scoped, tag = 'output window, operand 0, single buffered']
    %11 = vsyncpa [#allocation4], 0
    %12 = vsyncpa [#allocation7], 0
    %13 = vsyncpa [#allocation5], 0
    loop: start=0, step=1, limit=5
    $region2: #{tpu_custom_call.1} parent=1 // loop_pre_header
      _
    $region3: #{tpu_custom_call.1} parent=1 // loop_header
      %s15 = sphi 0, %s19
      %p16 = scmp.ge.s32.totalorder %s15, 5
      %s23 = sphi 0, %s23
      %s25 = sphi 0, %s23
      %s26 = sphi 0, %s25
      %s40 = sphi 0, %s26
      %s44 = sphi 0, %s44
      %s46 = sphi 0, %s44
      %s47 = sphi 0, %s46
      %s61 = sphi 0, %s47
      %s65 = sphi 0, %s65
      %s67 = sphi 0, %s65
      %s68 = sphi 0, %s67
      %s82 = sphi 0, %s68
      %s86 = sphi 0, %s86
      %s88 = sphi 0, %s86
      %s89 = sphi 0, %s88
      %s103 = sphi 0, %s89
      %s109 = sphi 0, %s111
      %s112 = sphi 0, %s109
      %s113 = sphi 0, %s112
      %s129 = sphi 0, %s113
      %s135 = sphi 0, %s137
      %s138 = sphi 0, %s135
      %s139 = sphi 0, %s138
      %s155 = sphi 0, %s139
      %s159 = sphi 0, %s159
      %s161 = sphi 0, %s159
      %s162 = sphi 0, %s161
      %s176 = sphi 0, %s162
    $region4: #{tpu_custom_call.1} parent=1 // loop_header_branch
      %18 = sbr.rel (%p16) target = $region8
    $region5: #{tpu_custom_call.1} parent=1 // loop_body
      %s20 = ssub.s32 %s15, 1
      %s21 = ssub.s32 %s15, 2
      %s22 = sadd.s32 %s15, 1
      %s24 = sadd.s32 %s23, 1
      %p27 = scmp.eq.s32.totalorder %s15, 2
      %p28 = scmp.ne.s32.totalorder %s23, %s25
      %p29 = scmp.eq.s32.totalorder %s15, 0
      %p30 = por %p28, %p29
      %p31 = scmp.ne.s32.totalorder %s23, %s25
      %p32 = scmp.eq.s32.totalorder %s20, 2
      %p33 = por %p31, %p32
      %p34 = scmp.ne.s32.totalorder %s25, %s26
      %p35 = scmp.eq.s32.totalorder %s20, 0
      %p36 = por %p34, %p35
      %p37 = scmp.ne.s32.totalorder %s25, %s26
      %p38 = scmp.eq.s32.totalorder %s21, 2
      %p39 = por %p37, %p38
      %p41 = scmp.ne.s32.totalorder %s26, %s40
      %p42 = scmp.eq.s32.totalorder %s21, 0
      %p43 = por %p41, %p42
      %s45 = sadd.s32 %s44, 1
      %p48 = scmp.eq.s32.totalorder %s15, 2
      %p49 = scmp.ne.s32.totalorder %s44, %s46
      %p50 = scmp.eq.s32.totalorder %s15, 0
      %p51 = por %p49, %p50
      %p52 = scmp.ne.s32.totalorder %s44, %s46
      %p53 = scmp.eq.s32.totalorder %s20, 2
      %p54 = por %p52, %p53
      %p55 = scmp.ne.s32.totalorder %s46, %s47
      %p56 = scmp.eq.s32.totalorder %s20, 0
      %p57 = por %p55, %p56
      %p58 = scmp.ne.s32.totalorder %s46, %s47
      %p59 = scmp.eq.s32.totalorder %s21, 2
      %p60 = por %p58, %p59
      %p62 = scmp.ne.s32.totalorder %s47, %s61
      %p63 = scmp.eq.s32.totalorder %s21, 0
      %p64 = por %p62, %p63
      %s66 = sadd.s32 %s65, 1
      %p69 = scmp.eq.s32.totalorder %s15, 2
      %p70 = scmp.ne.s32.totalorder %s65, %s67
      %p71 = scmp.eq.s32.totalorder %s15, 0
      %p72 = por %p70, %p71
      %p73 = scmp.ne.s32.totalorder %s65, %s67
      %p74 = scmp.eq.s32.totalorder %s20, 2
      %p75 = por %p73, %p74
      %p76 = scmp.ne.s32.totalorder %s67, %s68
      %p77 = scmp.eq.s32.totalorder %s20, 0
      %p78 = por %p76, %p77
      %p79 = scmp.ne.s32.totalorder %s67, %s68
      %p80 = scmp.eq.s32.totalorder %s21, 2
      %p81 = por %p79, %p80
      %p83 = scmp.ne.s32.totalorder %s68, %s82
      %p84 = scmp.eq.s32.totalorder %s21, 0
      %p85 = por %p83, %p84
      %s87 = sadd.s32 %s86, 1
      %p90 = scmp.eq.s32.totalorder %s15, 2
      %p91 = scmp.ne.s32.totalorder %s86, %s88
      %p92 = scmp.eq.s32.totalorder %s15, 0
      %p93 = por %p91, %p92
      %p94 = scmp.ne.s32.totalorder %s86, %s88
      %p95 = scmp.eq.s32.totalorder %s20, 2
      %p96 = por %p94, %p95
      %p97 = scmp.ne.s32.totalorder %s88, %s89
      %p98 = scmp.eq.s32.totalorder %s20, 0
      %p99 = por %p97, %p98
      %p100 = scmp.ne.s32.totalorder %s88, %s89
      %p101 = scmp.eq.s32.totalorder %s21, 2
      %p102 = por %p100, %p101
      %p104 = scmp.ne.s32.totalorder %s89, %s103
      %p105 = scmp.eq.s32.totalorder %s21, 0
      %p106 = por %p104, %p105
      %s107 = ssub.s32 %s15, %s22
      %p108 = scmp.eq.s32.totalorder %s107, 0
      %s110 = sadd.s32 %s109, 1
      %s111 = scalar_select %p108, %s109, %s110
      %p114 = pneg %p108
      %p115 = scmp.eq.s32.totalorder %s15, 2
      %p116 = por %p114, %p115
      %p117 = scmp.ne.s32.totalorder %s109, %s112
      %p118 = scmp.eq.s32.totalorder %s15, 0
      %p119 = por %p117, %p118
      %p120 = scmp.ne.s32.totalorder %s109, %s112
      %p121 = scmp.eq.s32.totalorder %s20, 2
      %p122 = por %p120, %p121
      %p123 = scmp.ne.s32.totalorder %s112, %s113
      %p124 = scmp.eq.s32.totalorder %s20, 0
      %p125 = por %p123, %p124
      %p126 = scmp.ne.s32.totalorder %s112, %s113
      %p127 = scmp.eq.s32.totalorder %s21, 2
      %p128 = por %p126, %p127
      %p130 = scmp.ne.s32.totalorder %s113, %s129
      %p131 = scmp.eq.s32.totalorder %s21, 0
      %p132 = por %p130, %p131
      %s133 = ssub.s32 %s15, %s22
      %p134 = scmp.eq.s32.totalorder %s133, 0
      %s136 = sadd.s32 %s135, 1
      %s137 = scalar_select %p134, %s135, %s136
      %p140 = pneg %p134
      %p141 = scmp.eq.s32.totalorder %s15, 2
      %p142 = por %p140, %p141
      %p143 = scmp.ne.s32.totalorder %s135, %s138
      %p144 = scmp.eq.s32.totalorder %s15, 0
      %p145 = por %p143, %p144
      %p146 = scmp.ne.s32.totalorder %s135, %s138
      %p147 = scmp.eq.s32.totalorder %s20, 2
      %p148 = por %p146, %p147
      %p149 = scmp.ne.s32.totalorder %s138, %s139
      %p150 = scmp.eq.s32.totalorder %s20, 0
      %p151 = por %p149, %p150
      %p152 = scmp.ne.s32.totalorder %s138, %s139
      %p153 = scmp.eq.s32.totalorder %s21, 2
      %p154 = por %p152, %p153
      %p156 = scmp.ne.s32.totalorder %s139, %s155
      %p157 = scmp.eq.s32.totalorder %s21, 0
      %p158 = por %p156, %p157
      %s160 = sadd.s32 %s159, 1
      %p163 = scmp.eq.s32.totalorder %s15, 2
      %p164 = scmp.ne.s32.totalorder %s159, %s161
      %p165 = scmp.eq.s32.totalorder %s15, 0
      %p166 = por %p164, %p165
      %p167 = scmp.ne.s32.totalorder %s159, %s161
      %p168 = scmp.eq.s32.totalorder %s20, 2
      %p169 = por %p167, %p168
      %p170 = scmp.ne.s32.totalorder %s161, %s162
      %p171 = scmp.eq.s32.totalorder %s20, 0
      %p172 = por %p170, %p171
      %p173 = scmp.ne.s32.totalorder %s161, %s162
      %p174 = scmp.eq.s32.totalorder %s21, 2
      %p175 = por %p173, %p174
      %p177 = scmp.ne.s32.totalorder %s162, %s176
      %p178 = scmp.eq.s32.totalorder %s21, 0
      %p179 = por %p177, %p178
      %p180 = scmp.le.s32.totalorder 1, %s15
      %p181 = scmp.lt.s32.totalorder %s15, 4
      %p182 = pnand %p180, %p181
      %p183 = pneg %p182
      // Predicated region
      $region9: #{tpu_custom_call.1} parent=5 // pred_check
        _
      $region10: #{tpu_custom_call.1} parent=5 // pred_check_branch
        %185 = sbr.rel (%p182) target = $region12
      $region11: #{tpu_custom_call.1} parent=5 // pred_region
        %s186 = ssub.s32 %s15, 1
        // Predicated region
        $region13: #{tpu_custom_call.1} parent=11 // pred_check
          %p187 = pneg %p36
        $region14: #{tpu_custom_call.1} parent=11 // pred_check_branch
          %189 = sbr.rel (%p187) target = $region16
        $region15: #{tpu_custom_call.1} parent=11 // pred_region
          %191 = vsyncadd [#allocation4], 0
          %s193 = sshll.u32 %s0, 4
          %s194 = int_to_ptr.hbm [resolvable:$true] %s193
          %s195 = sshll.u32 [#allocation3], 4
          %s196 = int_to_ptr.vmem [resolvable:$true] %s195
          %198 = dma.hbm_to_vmem [thread:$0]  %s194, 16, %s196, [#allocation4]
        $region16: #{tpu_custom_call.1} parent=11 // pred_fallthru
          _
        // Predicated region
        $region17: #{tpu_custom_call.1} parent=11 // pred_check
          %p199 = pneg %p57
        $region18: #{tpu_custom_call.1} parent=11 // pred_check_branch
          %201 = sbr.rel (%p199) target = $region20
        $region19: #{tpu_custom_call.1} parent=11 // pred_region
          %203 = vsyncadd [#allocation7], 0
          %s205 = sshll.u32 %s1, 4
          %s206 = int_to_ptr.hbm [resolvable:$true] %s205
          %s207 = sshll.u32 [#allocation6], 4
          %s208 = int_to_ptr.vmem [resolvable:$true] %s207
          %210 = dma.hbm_to_vmem [thread:$0]  %s206, 16, %s208, [#allocation7]
        $region20: #{tpu_custom_call.1} parent=11 // pred_fallthru
          _
        // Predicated region
        $region21: #{tpu_custom_call.1} parent=11 // pred_check
          %p211 = pneg %p78
        $region22: #{tpu_custom_call.1} parent=11 // pred_check_branch
          %213 = sbr.rel (%p211) target = $region24
        $region23: #{tpu_custom_call.1} parent=11 // pred_region
          _
        $region24: #{tpu_custom_call.1} parent=11 // pred_fallthru
          _
        // Predicated region
        $region25: #{tpu_custom_call.1} parent=11 // pred_check
          %p214 = pneg %p99
        $region26: #{tpu_custom_call.1} parent=11 // pred_check_branch
          %216 = sbr.rel (%p214) target = $region28
        $region27: #{tpu_custom_call.1} parent=11 // pred_region
          _
        $region28: #{tpu_custom_call.1} parent=11 // pred_fallthru
          _
      $region12: #{tpu_custom_call.1} parent=5 // pred_fallthru
        _
      %p217 = scmp.lt.s32.totalorder %s15, 3
      // Predicated region
      $region29: #{tpu_custom_call.1} parent=5 // pred_check
        %p218 = pneg %p217
      $region30: #{tpu_custom_call.1} parent=5 // pred_check_branch
        %220 = sbr.rel (%p218) target = $region32
      $region31: #{tpu_custom_call.1} parent=5 // pred_region
        // Predicated region
        $region33: #{tpu_custom_call.1} parent=31 // pred_check
          %p221 = pneg %p119
        $region34: #{tpu_custom_call.1} parent=31 // pred_check_branch
          %223 = sbr.rel (%p221) target = $region36
        $region35: #{tpu_custom_call.1} parent=31 // pred_region
          %s224 = sand.u32 %s15, 1
          %s225 = scalar_lea.sflag [#allocation4], %s224
          %s226 = sand.u32 %s109, 1
          %s227 = smul.addr %s226, 8
          %s228 = scalar_lea.vmem [#allocation8], %s227
          %230 = vsyncadd %s225, 0
          %s231 = smul.addr %s15, 8
          %s232 = scalar_lea.hbm %s4, %s231
          %s234 = sshll.u32 %s232, 4
          %s235 = int_to_ptr.hbm [resolvable:$true] %s234
          %s236 = sshll.u32 %s228, 4
          %s237 = int_to_ptr.vmem [resolvable:$true] %s236
          %239 = dma.hbm_to_vmem [thread:$0]  %s235, 128, %s237, %s225
        $region36: #{tpu_custom_call.1} parent=31 // pred_fallthru
          _
        // Predicated region
        $region37: #{tpu_custom_call.1} parent=31 // pred_check
          %p240 = pneg %p145
        $region38: #{tpu_custom_call.1} parent=31 // pred_check_branch
          %242 = sbr.rel (%p240) target = $region40
        $region39: #{tpu_custom_call.1} parent=31 // pred_region
          %s243 = sand.u32 %s15, 1
          %s244 = scalar_lea.sflag [#allocation4], %s243
          %s245 = sand.u32 %s135, 1
          %s246 = smul.addr %s245, 8
          %s247 = scalar_lea.vmem [#allocation9], %s246
          %249 = vsyncadd %s244, 0
          %s250 = smul.addr %s15, 8
          %s251 = scalar_lea.hbm %s5, %s250
          %s253 = sshll.u32 %s251, 4
          %s254 = int_to_ptr.hbm [resolvable:$true] %s253
          %s255 = sshll.u32 %s247, 4
          %s256 = int_to_ptr.vmem [resolvable:$true] %s255
          %258 = dma.hbm_to_vmem [thread:$0]  %s254, 128, %s256, %s244
        $region40: #{tpu_custom_call.1} parent=31 // pred_fallthru
          _
      $region32: #{tpu_custom_call.1} parent=5 // pred_fallthru
        _
      %p259 = scmp.le.s32.totalorder 1, %s15
      %p260 = scmp.lt.s32.totalorder %s15, 4
      %p261 = pnand %p259, %p260
      %p262 = pneg %p261
      // Predicated region
      $region41: #{tpu_custom_call.1} parent=5 // pred_check
        _
      $region42: #{tpu_custom_call.1} parent=5 // pred_check_branch
        %264 = sbr.rel (%p261) target = $region44
      $region43: #{tpu_custom_call.1} parent=5 // pred_region
        %s265 = ssub.s32 %s15, 1
        // Predicated region
        $region45: #{tpu_custom_call.1} parent=43 // pred_check
          %p266 = pneg %p36
        $region46: #{tpu_custom_call.1} parent=43 // pred_check_branch
          %268 = sbr.rel (%p266) target = $region48
        $region47: #{tpu_custom_call.1} parent=43 // pred_region
          %270 = dma.done [#allocation4], 16
        $region48: #{tpu_custom_call.1} parent=43 // pred_fallthru
          _
        // Predicated region
        $region49: #{tpu_custom_call.1} parent=43 // pred_check
          %p271 = pneg %p57
        $region50: #{tpu_custom_call.1} parent=43 // pred_check_branch
          %273 = sbr.rel (%p271) target = $region52
        $region51: #{tpu_custom_call.1} parent=43 // pred_region
          %275 = dma.done [#allocation7], 16
        $region52: #{tpu_custom_call.1} parent=43 // pred_fallthru
          _
        %s276 = sand.u32 %s20, 1
        %s277 = scalar_lea.sflag [#allocation4], %s276
        %s278 = sand.u32 %s112, 1
        %s279 = smul.addr %s278, 8
        %s280 = scalar_lea.vmem [#allocation8], %s279
        // Predicated region
        $region53: #{tpu_custom_call.1} parent=43 // pred_check
          %p281 = pneg %p125
        $region54: #{tpu_custom_call.1} parent=43 // pred_check_branch
          %283 = sbr.rel (%p281) target = $region56
        $region55: #{tpu_custom_call.1} parent=43 // pred_region
          %285 = dma.done %s277, 128
        $region56: #{tpu_custom_call.1} parent=43 // pred_fallthru
          _
        %s286 = sand.u32 %s20, 1
        %s287 = scalar_lea.sflag [#allocation4], %s286
        %s288 = sand.u32 %s138, 1
        %s289 = smul.addr %s288, 8
        %s290 = scalar_lea.vmem [#allocation9], %s289
        // Predicated region
        $region57: #{tpu_custom_call.1} parent=43 // pred_check
          %p291 = pneg %p151
        $region58: #{tpu_custom_call.1} parent=43 // pred_check_branch
          %293 = sbr.rel (%p291) target = $region60
        $region59: #{tpu_custom_call.1} parent=43 // pred_region
          %295 = dma.done %s287, 128
        $region60: #{tpu_custom_call.1} parent=43 // pred_fallthru
          _
        %p296 = pneg %p36
        %p297 = pneg %p33
        %p298 = pneg %p57
        %p299 = pneg %p54
        %p300 = pneg %p78
        %p301 = pneg %p75
        %p302 = pneg %p99
        %p303 = pneg %p96
        %s304 = sand.u32 %s20, 1
        %s305 = scalar_lea.sflag [#allocation4], %s304
        %s306 = sand.u32 %s112, 1
        %s307 = smul.addr %s306, 8
        %s308 = scalar_lea.vmem [#allocation8], %s307
        %p309 = pneg %p125
        %p310 = pneg %p122
        %s311 = sand.u32 %s20, 1
        %s312 = scalar_lea.sflag [#allocation4], %s311
        %s313 = sand.u32 %s138, 1
        %s314 = smul.addr %s313, 8
        %s315 = scalar_lea.vmem [#allocation9], %s314
        %p316 = pneg %p151
        %p317 = pneg %p148
        %p318 = pneg %p172
        %p319 = pneg %p169
        %p320 = scmp.eq.s32.totalorder %s20, 0
        // Predicated region
        $region61: #{tpu_custom_call.1} parent=43 // pred_check
          %p321 = pneg %p320
        $region62: #{tpu_custom_call.1} parent=43 // pred_check_branch
          %323 = sbr.rel (%p321) target = $region64
        $region63: #{tpu_custom_call.1} parent=43 // pred_region
          %324 = vst [vmem:[#allocation2] sm:$0xff] 0.0
        $region64: #{tpu_custom_call.1} parent=43 // pred_fallthru
          _
        %v325 = vld [vmem:[%s280] sm:$0xff]
        %v326 = vxor.u32 %v325, 2147483648
        %v327 = vmul.f32 %v326, 1.442695
        %v328 = vpow.pop %v327
        %v329 = vadd.f32 %v328, 1.0
        %v330 = vrcp.pop %v329
        %v331 = vmul.f32 %v329, %v330
        %v332 = vsub.f32 1.0, %v331
        %v333 = vmul.f32 %v330, %v332
        %v334 = vadd.f32 %v330, %v333
        %vm335 = vweird.f32 %v329
        %vm336 = vweird.f32 %v330
        %vm337 = vmor %vm335, %vm336
        %v338 = vsel %vm337, %v330, %v334
        %v339 = vand.u32 2147483647, %v329
        %vm340 = vcmp.eq.f32.partialorder %v339, 8.507059e+37
        %v341 = vand.u32 %v329, 2147483648
        %v342 = vor.u32 1.1754944e-38, %v341
        %v343 = vsel %vm340, %v342, %v338
        %v344 = vmul.f32 1.0, %v343
        %v345 = vld [vmem:[%s290] sm:$0xff]
        %v346 = vld [vmem:[#allocation3] sm:$0x1]
        %v347 = vld [vmem:[#allocation6] sm:$0x1]
        %v348 = vld [vmem:[%s2] sm:$0x1]
        %v349 = vld [vmem:[%s3] sm:$0x1]
        %v350 = vsub.f32 1.0, %v346
        %v351 = vmul.f32 %v349, 2.0
        %v352 = vmul.f32 %v351, %v350
        %v353 = vmul.f32 %v351, %v346
        %vm354 = vcmp.eq.f32.partialorder %v345, 1.0
        %v355 = vsel %vm354, 1, 0
        %v356 = vcvt.s32.f32 %v355
        %vm357 = vcmp.eq.f32.partialorder %v345, 0.0
        %v358 = vsel %vm357, 1, 0
        %v359 = vcvt.s32.f32 %v358
        %v361 = vperm.slane %v347, 0
        %v363 = vsub.f32 %v344, %v361
        %v364 = vmul.f32 %v363, %v363
        %v366 = vperm.slane %v350, 0
        %v368 = vmul.f32 %v366, %v364
        %v370 = vperm.slane %v352, 0
        %v372 = vmul.f32 %v370, %v344
        %v373 = vsub.f32 %v368, %v372
        %v374 = vmul.f32 %v356, %v373
        %v376 = vperm.slane %v348, 0
        %v378 = vsub.f32 %v344, %v376
        %v379 = vmul.f32 %v378, %v378
        %v381 = vperm.slane %v346, 0
        %v383 = vmul.f32 %v381, %v379
        %v385 = vperm.slane %v353, 0
        %v387 = vmul.f32 %v385, %v344
        %v388 = vadd.f32 %v383, %v387
        %v389 = vmul.f32 %v359, %v388
        %v390 = vadd.f32 %v374, %v389
        %v391 = vld [vmem:[#allocation2] sm:$0xff]
        %v392 = vadd.f32 %v391, %v390
        %393 = vst [vmem:[#allocation2] sm:$0xff] %v392
        %p394 = scmp.eq.s32.totalorder %s20, 2
        // Predicated region
        $region65: #{tpu_custom_call.1} parent=43 // pred_check
          %p395 = pneg %p394
        $region66: #{tpu_custom_call.1} parent=43 // pred_check_branch
          %397 = sbr.rel (%p395) target = $region68
        $region67: #{tpu_custom_call.1} parent=43 // pred_region
          %v398 = vld [vmem:[#allocation2] sm:$0xff]
          %v399 = vrot.slane %v398, 4
          %v400 = vadd.f32 %v398, %v399
          %v401 = vrot.slane %v400, 2
          %v402 = vadd.f32 %v400, %v401
          %v403 = vrot.slane %v402, 1
          %v404 = vadd.f32 %v402, %v403
          %v405 = vmul.f32 %v404, 0.05
          %v406 = vmul.f32 %v346, %v350
          %v407 = vmul.f32 %v406, %v349
          %v408 = vsub.f32 2.0, %v349
          %v409 = vmul.f32 %v407, %v408
          %v410 = vadd.f32 %v405, %v409
          %vm411 = vcmask 1040384
          %v412 = vsel %vm411, %v410, 0.0
          %413 = vadd.xlane.f32.xlu0 %v412
          %v414 = vpop.xlane.xlu0 %413
          %v415 = vrot.slane %v414, 4
          %v416 = vadd.f32 %v414, %v415
          %v417 = vrot.slane %v416, 2
          %v418 = vadd.f32 %v416, %v417
          %v419 = vrot.slane %v418, 1
          %v420 = vadd.f32 %v418, %v419
          %s421 = vtos %v420
          %v422 = vstv %s421
          %vm423 = vcmask 0
          %424 = vst.msk [vmem:[#allocation10] sm:$0x1] %vm423, %v422
        $region68: #{tpu_custom_call.1} parent=43 // pred_fallthru
          _
        // Predicated region
        $region69: #{tpu_custom_call.1} parent=43 // pred_check
          %p425 = pneg %p169
        $region70: #{tpu_custom_call.1} parent=43 // pred_check_branch
          %427 = sbr.rel (%p425) target = $region72
        $region71: #{tpu_custom_call.1} parent=43 // pred_region
          %429 = vsyncadd [#allocation5], 0
          %s431 = sshll.u32 [#allocation10], 4
          %s432 = int_to_ptr.vmem [resolvable:$true] %s431
          %s433 = sshll.u32 %s6, 4
          %s434 = int_to_ptr.hbm [resolvable:$true] %s433
          %436 = dma.vmem_to_hbm [thread:$0]  %s432, 16, %s434, [#allocation5]
        $region72: #{tpu_custom_call.1} parent=43 // pred_fallthru
          _
        // Predicated region
        $region73: #{tpu_custom_call.1} parent=43 // pred_check
          %p437 = pneg %p169
        $region74: #{tpu_custom_call.1} parent=43 // pred_check_branch
          %439 = sbr.rel (%p437) target = $region76
        $region75: #{tpu_custom_call.1} parent=43 // pred_region
          %441 = dma.done [#allocation5], 16
        $region76: #{tpu_custom_call.1} parent=43 // pred_fallthru
          _
      $region44: #{tpu_custom_call.1} parent=5 // pred_fallthru
        _
      %p442 = scmp.le.s32.totalorder 2, %s15
      // Predicated region
      $region77: #{tpu_custom_call.1} parent=5 // pred_check
        %p443 = pneg %p442
      $region78: #{tpu_custom_call.1} parent=5 // pred_check_branch
        %445 = sbr.rel (%p443) target = $region80
      $region79: #{tpu_custom_call.1} parent=5 // pred_region
        %s446 = ssub.s32 %s15, 2
      $region80: #{tpu_custom_call.1} parent=5 // pred_fallthru
        _
    $region6: #{tpu_custom_call.1} parent=1 // loop_footer
      %s19 = sadd.s32 1, %s15
    $region7: #{tpu_custom_call.1} parent=1 // loop_footer_branch
      %14 = sbr.rel target = $region3
    $region8: #{tpu_custom_call.1} parent=1 // loop_exit
      _
    %447 = vsyncpa [#allocation4], 1
    %s448 = scalar_lea.sflag [#allocation4], 1
    %449 = vsyncpa %s448, 1
    %450 = vsyncpa [#allocation7], 1
    %451 = vsyncpa [#allocation5], 1
    %s452 = scalar_lea.sflag [#allocation5], 1
    %453 = vsyncpa %s452, 1

</llo_original>
